<compile_context>
chip_gen: v5e
topology: v5e:2x2
jax: 0.10.0
libtpu: 0.0.40
codegen_flags: <defaults>
</compile_context>

<pallas_src>
import jax
import jax.numpy as jnp
from jax.experimental import pallas as pl
from jax.experimental.pallas import tpu as pltpu

NEG_SLOPE = 0.01  # PyTorch nn.LeakyReLU default

# Original (in, out) widths of the six Linear layers.
DIMS = [(166, 128), (128, 86), (86, 48), (48, 86), (86, 128), (128, 166)]
D_IN = DIMS[0][0]          # 166
D_OUT = DIMS[-1][1]        # 166


def _round_up(n, m):
    return ((n + m - 1) // m) * m


PAD_DIMS = [(_round_up(i, 128), _round_up(o, 128)) for i, o in DIMS]
D_IN_PAD = PAD_DIMS[0][0]  # 256
TILE_ALIGN = 16            # bf16 sublane packing (second-minor multiple of 16)


def _leaky_relu(x):
    # mul + max (no mask vreg) instead of compare + select
    return jnp.maximum(x, NEG_SLOPE * x)


def autoencoder_kernel(x_ref,
                       w1, b1, w2, b2, w3, b3, w4, b4, w5, b5, w6, b6,
                       out_ref, hpad_ref):
    # Zero-pad the 166-wide bf16 input to 256 lanes inside VMEM. Padded weight
    # rows/cols and padded bias lanes are exact zeros, so results are exact.
    tb = hpad_ref.shape[0]
    hpad_ref[:, D_IN:] = jnp.zeros((tb, D_IN_PAD - D_IN), hpad_ref.dtype)
    hpad_ref[:, :D_IN] = x_ref[...]
    h = hpad_ref[...]                              # (tile_b, 256) bf16

    for w_ref, b_ref in ((w1, b1), (w2, b2), (w3, b3),
                         (w4, b4), (w5, b5), (w6, b6)):
        acc = jnp.dot(h.astype(jnp.bfloat16), w_ref[...],
                      preferred_element_type=jnp.float32)
        h = _leaky_relu(acc + b_ref[...])          # f32

    # h is (tile_b, 256) f32; store the real 166 lanes (masked vst on the
    # last vreg — free under the mem-bound DMA).
    out_ref[...] = h[:, :D_OUT]


def init_params(key):
    """PyTorch-Linear-style init (uniform +/- 1/sqrt(fan_in)) on the original
    widths, then zero-padded to lane-aligned shapes. Weights stored transposed
    (in, out) and cast to bf16; biases kept f32 as (1, out)."""
    params = []
    for (fi, fo), (fip, fop) in zip(DIMS, PAD_DIMS):
        key, kw, kb = jax.random.split(key, 3)
        bound = 1.0 / (fi ** 0.5)
        w = jax.random.uniform(kw, (fi, fo), jnp.float32, -bound, bound)
        b = jax.random.uniform(kb, (1, fo), jnp.float32, -bound, bound)
        w_pad = jnp.zeros((fip, fop), jnp.float32).at[:fi, :fo].set(w)
        b_pad = jnp.zeros((1, fop), jnp.float32).at[:, :fo].set(b)
        params.append((w_pad.astype(jnp.bfloat16), b_pad))
    return params


def autoencoder_forward(x, params, *, tile_b=4096):
    """x: (B, 166), f32 or bf16. params: list of six (W_pad bf16 (in_pad,out_pad),
    b_pad f32 (1,out_pad)). Returns (B, 166) f32."""
    B, D = x.shape
    assert D == D_IN

    # bf16 at the HBM boundary: the kernel already casts operands to bf16, so
    # numerics are unchanged but input DMA bytes halve. (Ideally the producer
    # supplies bf16 directly so this cast fuses upstream.)
    x = x.astype(jnp.bfloat16)

    # Batch tile: multiple of 16, and capped so the grid has >=2 steps whenever
    # the batch allows it (v7x megacore needs >=2 steps on the parallel axis).
    b_align = _round_up(B, TILE_ALIGN)
    if b_align >= 2 * TILE_ALIGN:
        tile_b = min(tile_b, _round_up(pl.cdiv(b_align, 2), TILE_ALIGN))
    tile_b = max(TILE_ALIGN, min(tile_b, b_align))
    B_pad = _round_up(B, tile_b)
    if B_pad != B:
        x = jnp.pad(x, ((0, B_pad - B), (0, 0)))

    flat = []
    for w, b in params:
        flat.extend([w, b])

    grid = (B_pad // tile_b,)
    x_spec = pl.BlockSpec((tile_b, D_IN), lambda i: (i, 0))
    out_spec = pl.BlockSpec((tile_b, D_OUT), lambda i: (i, 0))
    # Weights/biases: full-array blocks, constant index_map -> VMEM-resident.
    const_specs = []
    for w, b in params:
        const_specs.append(pl.BlockSpec(w.shape, lambda i: (0, 0)))
        const_specs.append(pl.BlockSpec(b.shape, lambda i: (0, 0)))

    # VMEM budget against the actual shapes: double-buffered bf16 input and
    # f32 output blocks, double-buffered (tiny) params, the bf16 pad scratch,
    # plus a generous allowance for live f32 intermediates; capped under
    # v7x's 64 MiB physical VMEM.
    param_bytes = sum(int(a.size) * a.dtype.itemsize for a in flat)
    in_blk = tile_b * D_IN * 2          # bf16 input block
    out_blk = tile_b * D_OUT * 4        # f32 output block
    pad_scratch = tile_b * D_IN_PAD * 2
    interm = 3 * tile_b * D_IN_PAD * 4
    vmem_bytes = int(1.25 * (2 * param_bytes + 2 * in_blk + 2 * out_blk
                             + pad_scratch + interm)) + (1 << 20)
    vmem_bytes = min(vmem_bytes, 56 << 20)

    flops_per_row = 2 * sum(i * o for i, o in PAD_DIMS)  # padded dims execute
    cost = pl.CostEstimate(
        flops=flops_per_row * B_pad,
        transcendentals=0,
        bytes_accessed=B_pad * D_IN * 2 + B_pad * D_OUT * 4 + param_bytes,
    )

    out = pl.pallas_call(
        autoencoder_kernel,
        out_shape=jax.ShapeDtypeStruct((B_pad, D_OUT), jnp.float32),
        grid=grid,
        in_specs=[x_spec] + const_specs,
        out_specs=out_spec,
        scratch_shapes=[pltpu.VMEM((tile_b, D_IN_PAD), jnp.bfloat16)],
        compiler_params=pltpu.CompilerParams(
            dimension_semantics=("parallel",),
            vmem_limit_bytes=vmem_bytes,
        ),
        cost_estimate=cost,
    )(x, *flat)

    return out if B_pad == B else out[:B]


def reference_forward(x, params):
    """Pure-JAX reference matching the kernel's numerics
    (bf16 matmul operands, f32 accumulation, f32 bias/activation)."""
    h = jnp.pad(x.astype(jnp.bfloat16), ((0, 0), (0, D_IN_PAD - D_IN)))
    for w, b in params:
        acc = jnp.dot(h.astype(jnp.bfloat16), w,
                      preferred_element_type=jnp.float32) + b
        h = jnp.maximum(acc, NEG_SLOPE * acc)
    return h[:, :D_OUT]


if __name__ == "__main__":
    key = jax.random.PRNGKey(0)
    key, kx = jax.random.split(key)
    batch = 8
    x = jax.random.normal(kx, (batch, 166), jnp.float32)

    params = init_params(key)

    out = autoencoder_forward(x, params)
    out = jax.block_until_ready(out)

    ref = reference_forward(x, params)
    assert out.shape == (batch, 166), out.shape
    assert jnp.allclose(out, ref, atol=1e-2, rtol=1e-2), (
        float(jnp.max(jnp.abs(out - ref))))

    print("KERNEL_OK")
</pallas_src>

<mosaic_0001>
module attributes {stable_mosaic.version = 11 : i64} {
  func.func @autoencoder_kernel(%arg0: i32, %arg1: memref<16x166xbf16, #tpu.memory_space<vmem>>, %arg2: memref<256x128xbf16, #tpu.memory_space<vmem>>, %arg3: memref<1x128xf32, #tpu.memory_space<vmem>>, %arg4: memref<128x128xbf16, #tpu.memory_space<vmem>>, %arg5: memref<1x128xf32, #tpu.memory_space<vmem>>, %arg6: memref<128x128xbf16, #tpu.memory_space<vmem>>, %arg7: memref<1x128xf32, #tpu.memory_space<vmem>>, %arg8: memref<128x128xbf16, #tpu.memory_space<vmem>>, %arg9: memref<1x128xf32, #tpu.memory_space<vmem>>, %arg10: memref<128x128xbf16, #tpu.memory_space<vmem>>, %arg11: memref<1x128xf32, #tpu.memory_space<vmem>>, %arg12: memref<128x256xbf16, #tpu.memory_space<vmem>>, %arg13: memref<1x256xf32, #tpu.memory_space<vmem>>, %arg14: memref<16x166xf32, #tpu.memory_space<vmem>>, %arg15: memref<16x256xbf16, #tpu.memory_space<vmem>>) attributes {dimension_semantics = [#tpu.dimension_semantics<parallel>], iteration_bounds = array<i64: 1>, scalar_prefetch = 0 : i64, scratch_operands = 1 : i64, tpu.core_type = #tpu.core_type<tc>, window_params = [{transform_indices = @transform_0, window_bounds = array<i64: 16, 166>}, {pipeline_mode = #tpu.pipeline_mode<synchronous>, transform_indices = @transform_1, window_bounds = array<i64: 256, 128>}, {pipeline_mode = #tpu.pipeline_mode<synchronous>, transform_indices = @transform_2, window_bounds = array<i64: 1, 128>}, {pipeline_mode = #tpu.pipeline_mode<synchronous>, transform_indices = @transform_3, window_bounds = array<i64: 128, 128>}, {pipeline_mode = #tpu.pipeline_mode<synchronous>, transform_indices = @transform_4, window_bounds = array<i64: 1, 128>}, {pipeline_mode = #tpu.pipeline_mode<synchronous>, transform_indices = @transform_5, window_bounds = array<i64: 128, 128>}, {pipeline_mode = #tpu.pipeline_mode<synchronous>, transform_indices = @transform_6, window_bounds = array<i64: 1, 128>}, {pipeline_mode = #tpu.pipeline_mode<synchronous>, transform_indices = @transform_7, window_bounds = array<i64: 128, 128>}, {pipeline_mode = #tpu.pipeline_mode<synchronous>, transform_indices = @transform_8, window_bounds = array<i64: 1, 128>}, {pipeline_mode = #tpu.pipeline_mode<synchronous>, transform_indices = @transform_9, window_bounds = array<i64: 128, 128>}, {pipeline_mode = #tpu.pipeline_mode<synchronous>, transform_indices = @transform_10, window_bounds = array<i64: 1, 128>}, {pipeline_mode = #tpu.pipeline_mode<synchronous>, transform_indices = @transform_11, window_bounds = array<i64: 128, 256>}, {pipeline_mode = #tpu.pipeline_mode<synchronous>, transform_indices = @transform_12, window_bounds = array<i64: 1, 256>}, {transform_indices = @transform_13, window_bounds = array<i64: 16, 166>}]} {
    %cst = arith.constant 0.000000e+00 : bf16
    %0 = vector.broadcast %cst : bf16 to vector<16x90xbf16>
    %c0 = arith.constant 0 : index
    %c166 = arith.constant 166 : index
    %1 = vector.load %arg15[%c0, %c166] : memref<16x256xbf16, #tpu.memory_space<vmem>>, vector<16x90xbf16>
    tpu.vector_store %arg15[%c0, %c166], %0 {strides = array<i32>} : memref<16x256xbf16, #tpu.memory_space<vmem>>, vector<16x90xbf16>,
    %c0_0 = arith.constant 0 : index
    %c0_1 = arith.constant 0 : index
    %2 = vector.load %arg1[%c0_0, %c0_1] : memref<16x166xbf16, #tpu.memory_space<vmem>>, vector<16x166xbf16>
    %c0_2 = arith.constant 0 : index
    %c0_3 = arith.constant 0 : index
    %3 = vector.load %arg15[%c0_2, %c0_3] : memref<16x256xbf16, #tpu.memory_space<vmem>>, vector<16x166xbf16>
    tpu.vector_store %arg15[%c0_2, %c0_3], %2 {strides = array<i32>} : memref<16x256xbf16, #tpu.memory_space<vmem>>, vector<16x166xbf16>,
    %c0_4 = arith.constant 0 : index
    %c0_5 = arith.constant 0 : index
    %4 = vector.load %arg15[%c0_4, %c0_5] : memref<16x256xbf16, #tpu.memory_space<vmem>>, vector<16x256xbf16>
    %c0_6 = arith.constant 0 : index
    %c0_7 = arith.constant 0 : index
    %5 = vector.load %arg2[%c0_6, %c0_7] : memref<256x128xbf16, #tpu.memory_space<vmem>>, vector<256x128xbf16>
    %cst_8 = arith.constant dense<0.000000e+00> : vector<16x128xf32>
    %6 = tpu.matmul %4, %5, %cst_8 {dimension_numbers = #tpu.dot_dimension_numbers<[1], [0], [0], [1], [0, 0, 1, 1], [], []>} : vector<16x256xbf16>, vector<256x128xbf16>, vector<16x128xf32> -> vector<16x128xf32>
    %c0_9 = arith.constant 0 : index
    %c0_10 = arith.constant 0 : index
    %7 = vector.load %arg3[%c0_9, %c0_10] : memref<1x128xf32, #tpu.memory_space<vmem>>, vector<1x128xf32>
    %8 = vector.broadcast %7 : vector<1x128xf32> to vector<16x128xf32>
    %9 = arith.addf %6, %8 : vector<16x128xf32>
    %cst_11 = arith.constant 0.00999999977 : f32
    %10 = vector.broadcast %cst_11 : f32 to vector<16x128xf32>
    %11 = arith.mulf %10, %9 : vector<16x128xf32>
    %12 = arith.maximumf %9, %11 : vector<16x128xf32>
    %13 = arith.truncf %12 : vector<16x128xf32> to vector<16x128xbf16>
    %c0_12 = arith.constant 0 : index
    %c0_13 = arith.constant 0 : index
    %14 = vector.load %arg4[%c0_12, %c0_13] : memref<128x128xbf16, #tpu.memory_space<vmem>>, vector<128x128xbf16>
    %cst_14 = arith.constant dense<0.000000e+00> : vector<16x128xf32>
    %15 = tpu.matmul %13, %14, %cst_14 {dimension_numbers = #tpu.dot_dimension_numbers<[1], [0], [0], [1], [0, 0, 1, 1], [], []>} : vector<16x128xbf16>, vector<128x128xbf16>, vector<16x128xf32> -> vector<16x128xf32>
    %c0_15 = arith.constant 0 : index
    %c0_16 = arith.constant 0 : index
    %16 = vector.load %arg5[%c0_15, %c0_16] : memref<1x128xf32, #tpu.memory_space<vmem>>, vector<1x128xf32>
    %17 = vector.broadcast %16 : vector<1x128xf32> to vector<16x128xf32>
    %18 = arith.addf %15, %17 : vector<16x128xf32>
    %cst_17 = arith.constant 0.00999999977 : f32
    %19 = vector.broadcast %cst_17 : f32 to vector<16x128xf32>
    %20 = arith.mulf %19, %18 : vector<16x128xf32>
    %21 = arith.maximumf %18, %20 : vector<16x128xf32>
    %22 = arith.truncf %21 : vector<16x128xf32> to vector<16x128xbf16>
    %c0_18 = arith.constant 0 : index
    %c0_19 = arith.constant 0 : index
    %23 = vector.load %arg6[%c0_18, %c0_19] : memref<128x128xbf16, #tpu.memory_space<vmem>>, vector<128x128xbf16>
    %cst_20 = arith.constant dense<0.000000e+00> : vector<16x128xf32>
    %24 = tpu.matmul %22, %23, %cst_20 {dimension_numbers = #tpu.dot_dimension_numbers<[1], [0], [0], [1], [0, 0, 1, 1], [], []>} : vector<16x128xbf16>, vector<128x128xbf16>, vector<16x128xf32> -> vector<16x128xf32>
    %c0_21 = arith.constant 0 : index
    %c0_22 = arith.constant 0 : index
    %25 = vector.load %arg7[%c0_21, %c0_22] : memref<1x128xf32, #tpu.memory_space<vmem>>, vector<1x128xf32>
    %26 = vector.broadcast %25 : vector<1x128xf32> to vector<16x128xf32>
    %27 = arith.addf %24, %26 : vector<16x128xf32>
    %cst_23 = arith.constant 0.00999999977 : f32
    %28 = vector.broadcast %cst_23 : f32 to vector<16x128xf32>
    %29 = arith.mulf %28, %27 : vector<16x128xf32>
    %30 = arith.maximumf %27, %29 : vector<16x128xf32>
    %31 = arith.truncf %30 : vector<16x128xf32> to vector<16x128xbf16>
    %c0_24 = arith.constant 0 : index
    %c0_25 = arith.constant 0 : index
    %32 = vector.load %arg8[%c0_24, %c0_25] : memref<128x128xbf16, #tpu.memory_space<vmem>>, vector<128x128xbf16>
    %cst_26 = arith.constant dense<0.000000e+00> : vector<16x128xf32>
    %33 = tpu.matmul %31, %32, %cst_26 {dimension_numbers = #tpu.dot_dimension_numbers<[1], [0], [0], [1], [0, 0, 1, 1], [], []>} : vector<16x128xbf16>, vector<128x128xbf16>, vector<16x128xf32> -> vector<16x128xf32>
    %c0_27 = arith.constant 0 : index
    %c0_28 = arith.constant 0 : index
    %34 = vector.load %arg9[%c0_27, %c0_28] : memref<1x128xf32, #tpu.memory_space<vmem>>, vector<1x128xf32>
    %35 = vector.broadcast %34 : vector<1x128xf32> to vector<16x128xf32>
    %36 = arith.addf %33, %35 : vector<16x128xf32>
    %cst_29 = arith.constant 0.00999999977 : f32
    %37 = vector.broadcast %cst_29 : f32 to vector<16x128xf32>
    %38 = arith.mulf %37, %36 : vector<16x128xf32>
    %39 = arith.maximumf %36, %38 : vector<16x128xf32>
    %40 = arith.truncf %39 : vector<16x128xf32> to vector<16x128xbf16>
    %c0_30 = arith.constant 0 : index
    %c0_31 = arith.constant 0 : index
    %41 = vector.load %arg10[%c0_30, %c0_31] : memref<128x128xbf16, #tpu.memory_space<vmem>>, vector<128x128xbf16>
    %cst_32 = arith.constant dense<0.000000e+00> : vector<16x128xf32>
    %42 = tpu.matmul %40, %41, %cst_32 {dimension_numbers = #tpu.dot_dimension_numbers<[1], [0], [0], [1], [0, 0, 1, 1], [], []>} : vector<16x128xbf16>, vector<128x128xbf16>, vector<16x128xf32> -> vector<16x128xf32>
    %c0_33 = arith.constant 0 : index
    %c0_34 = arith.constant 0 : index
    %43 = vector.load %arg11[%c0_33, %c0_34] : memref<1x128xf32, #tpu.memory_space<vmem>>, vector<1x128xf32>
    %44 = vector.broadcast %43 : vector<1x128xf32> to vector<16x128xf32>
    %45 = arith.addf %42, %44 : vector<16x128xf32>
    %cst_35 = arith.constant 0.00999999977 : f32
    %46 = vector.broadcast %cst_35 : f32 to vector<16x128xf32>
    %47 = arith.mulf %46, %45 : vector<16x128xf32>
    %48 = arith.maximumf %45, %47 : vector<16x128xf32>
    %49 = arith.truncf %48 : vector<16x128xf32> to vector<16x128xbf16>
    %c0_36 = arith.constant 0 : index
    %c0_37 = arith.constant 0 : index
    %50 = vector.load %arg12[%c0_36, %c0_37] : memref<128x256xbf16, #tpu.memory_space<vmem>>, vector<128x256xbf16>
    %cst_38 = arith.constant dense<0.000000e+00> : vector<16x256xf32>
    %51 = tpu.matmul %49, %50, %cst_38 {dimension_numbers = #tpu.dot_dimension_numbers<[1], [0], [0], [1], [0, 0, 1, 1], [], []>} : vector<16x128xbf16>, vector<128x256xbf16>, vector<16x256xf32> -> vector<16x256xf32>
    %c0_39 = arith.constant 0 : index
    %c0_40 = arith.constant 0 : index
    %52 = vector.load %arg13[%c0_39, %c0_40] : memref<1x256xf32, #tpu.memory_space<vmem>>, vector<1x256xf32>
    %53 = vector.broadcast %52 : vector<1x256xf32> to vector<16x256xf32>
    %54 = arith.addf %51, %53 : vector<16x256xf32>
    %cst_41 = arith.constant 0.00999999977 : f32
    %55 = vector.broadcast %cst_41 : f32 to vector<16x256xf32>
    %56 = arith.mulf %55, %54 : vector<16x256xf32>
    %57 = arith.maximumf %54, %56 : vector<16x256xf32>
    %58 = vector.extract_strided_slice %57 {offsets = [0, 0], sizes = [16, 166], strides = [1, 1]} : vector<16x256xf32> to vector<16x166xf32>
    %c0_42 = arith.constant 0 : index
    %c0_43 = arith.constant 0 : index
    %59 = vector.load %arg14[%c0_42, %c0_43] : memref<16x166xf32, #tpu.memory_space<vmem>>, vector<16x166xf32>
    tpu.vector_store %arg14[%c0_42, %c0_43], %58 {strides = array<i32>} : memref<16x166xf32, #tpu.memory_space<vmem>>, vector<16x166xf32>,
    return
  }
  func.func @transform_0(%arg0: i32) -> (i32, i32) {
    %c0_i32 = arith.constant 0 : i32
    %c0_i32_0 = arith.constant 0 : i32
    return %arg0, %c0_i32 : i32, i32
  }
  func.func @transform_1(%arg0: i32) -> (i32, i32) {
    %c0_i32 = arith.constant 0 : i32
    %c0_i32_0 = arith.constant 0 : i32
    %c0_i32_1 = arith.constant 0 : i32
    return %c0_i32, %c0_i32_0 : i32, i32
  }
  func.func @transform_2(%arg0: i32) -> (i32, i32) {
    %c0_i32 = arith.constant 0 : i32
    %c0_i32_0 = arith.constant 0 : i32
    %c0_i32_1 = arith.constant 0 : i32
    return %c0_i32, %c0_i32_0 : i32, i32
  }
  func.func @transform_3(%arg0: i32) -> (i32, i32) {
    %c0_i32 = arith.constant 0 : i32
    %c0_i32_0 = arith.constant 0 : i32
    %c0_i32_1 = arith.constant 0 : i32
    return %c0_i32, %c0_i32_0 : i32, i32
  }
  func.func @transform_4(%arg0: i32) -> (i32, i32) {
    %c0_i32 = arith.constant 0 : i32
    %c0_i32_0 = arith.constant 0 : i32
    %c0_i32_1 = arith.constant 0 : i32
    return %c0_i32, %c0_i32_0 : i32, i32
  }
  func.func @transform_5(%arg0: i32) -> (i32, i32) {
    %c0_i32 = arith.constant 0 : i32
    %c0_i32_0 = arith.constant 0 : i32
    %c0_i32_1 = arith.constant 0 : i32
    return %c0_i32, %c0_i32_0 : i32, i32
  }
  func.func @transform_6(%arg0: i32) -> (i32, i32) {
    %c0_i32 = arith.constant 0 : i32
    %c0_i32_0 = arith.constant 0 : i32
    %c0_i32_1 = arith.constant 0 : i32
    return %c0_i32, %c0_i32_0 : i32, i32
  }
  func.func @transform_7(%arg0: i32) -> (i32, i32) {
    %c0_i32 = arith.constant 0 : i32
    %c0_i32_0 = arith.constant 0 : i32
    %c0_i32_1 = arith.constant 0 : i32
    return %c0_i32, %c0_i32_0 : i32, i32
  }
  func.func @transform_8(%arg0: i32) -> (i32, i32) {
    %c0_i32 = arith.constant 0 : i32
    %c0_i32_0 = arith.constant 0 : i32
    %c0_i32_1 = arith.constant 0 : i32
    return %c0_i32, %c0_i32_0 : i32, i32
  }
  func.func @transform_9(%arg0: i32) -> (i32, i32) {
    %c0_i32 = arith.constant 0 : i32
    %c0_i32_0 = arith.constant 0 : i32
    %c0_i32_1 = arith.constant 0 : i32
    return %c0_i32, %c0_i32_0 : i32, i32
  }
  func.func @transform_10(%arg0: i32) -> (i32, i32) {
    %c0_i32 = arith.constant 0 : i32
    %c0_i32_0 = arith.constant 0 : i32
    %c0_i32_1 = arith.constant 0 : i32
    return %c0_i32, %c0_i32_0 : i32, i32
  }
  func.func @transform_11(%arg0: i32) -> (i32, i32) {
    %c0_i32 = arith.constant 0 : i32
    %c0_i32_0 = arith.constant 0 : i32
    %c0_i32_1 = arith.constant 0 : i32
    return %c0_i32, %c0_i32_0 : i32, i32
  }
  func.func @transform_12(%arg0: i32) -> (i32, i32) {
    %c0_i32 = arith.constant 0 : i32
    %c0_i32_0 = arith.constant 0 : i32
    %c0_i32_1 = arith.constant 0 : i32
    return %c0_i32, %c0_i32_0 : i32, i32
  }
  func.func @transform_13(%arg0: i32) -> (i32, i32) {
    %c0_i32 = arith.constant 0 : i32
    %c0_i32_0 = arith.constant 0 : i32
    return %arg0, %c0_i32 : i32, i32
  }
}

</mosaic_0001>

<llo_original>
// kernel: tpu_custom_call.1
$region0: #{tpu_custom_call.1}
  #allocation0 [shape = 'u32[]', space=smem, size = 0x4, offset = 0x4, fixed_abs, tag = 'smem constant byte address 0x4 - core index']
  #allocation1 [shape = 'u32[72,128]{1,0:T(1,128)}', space=vmem, size = 0x9000, scoped, tag = 'internal scratch']
  #allocation2 [shape = 'bf16[16,256]{1,0:T(8,128)(2,1)}', space=vmem, size = 0x2000, scoped, tag = 'scratch operand']
  %s0 = inlined_call_operand.hbm [shape: bf16[16,166], index: 0, kind: input, shape index: {}]
  %s1 = inlined_call_operand.hbm [shape: bf16[256,128], index: 1, kind: input, shape index: {}]
  %s2 = inlined_call_operand.vmem [shape: f32[1,128], index: 2, kind: input, shape index: {}]
  %s3 = inlined_call_operand.hbm [shape: bf16[128,128], index: 3, kind: input, shape index: {}]
  %s4 = inlined_call_operand.hbm [shape: f32[1,128], index: 4, kind: input, shape index: {}]
  %s5 = inlined_call_operand.hbm [shape: bf16[128,128], index: 5, kind: input, shape index: {}]
  %s6 = inlined_call_operand.vmem [shape: f32[1,128], index: 6, kind: input, shape index: {}]
  %s7 = inlined_call_operand.hbm [shape: bf16[128,128], index: 7, kind: input, shape index: {}]
  %s8 = inlined_call_operand.vmem [shape: f32[1,128], index: 8, kind: input, shape index: {}]
  %s9 = inlined_call_operand.hbm [shape: bf16[128,128], index: 9, kind: input, shape index: {}]
  %s10 = inlined_call_operand.vmem [shape: f32[1,128], index: 10, kind: input, shape index: {}]
  %s11 = inlined_call_operand.hbm [shape: bf16[128,256], index: 11, kind: input, shape index: {}]
  %s12 = inlined_call_operand.vmem [shape: f32[1,256], index: 12, kind: input, shape index: {}]
  %s13 = inlined_call_operand.hbm [shape: f32[16,166], index: 13, kind: output, shape index: {}]
  %s14 = sld [smem:[#allocation0]]
  $region94: #{tpu_custom_call.1} parent=0
    _
  %s16 = ssub.s32 1, %s14
  %s17 = scalar_select 0, %s16, %s14
  $region1: #{tpu_custom_call.1} parent=0
    #allocation3 [shape = 'u8[8192]{0}', space=vmem, size = 0x2000, scoped, tag = 'input window, operand 0, single buffered']
    #allocation4 [shape = 's32[1]{0}', space=sflag, size = 0x4, scoped, tag = 'scoped memory for tpu_custom_call.1']
    #allocation5 [shape = 's32[1]{0}', space=sflag, size = 0x4, scoped, tag = 'scoped memory for tpu_custom_call.1']
    #allocation6 [shape = 'u8[65536]{0}', space=vmem, size = 0x10000, scoped, tag = 'input window, operand 1, single buffered']
    #allocation7 [shape = 's32[1]{0}', space=sflag, size = 0x4, scoped, tag = 'scoped memory for tpu_custom_call.1']
    #allocation8 [shape = 'u8[32768]{0}', space=vmem, size = 0x8000, scoped, tag = 'input window, operand 3, single buffered']
    #allocation9 [shape = 'u8[512]{0}', space=vmem, size = 0x400, scoped, tag = 'input window, operand 4, single buffered']
    #allocation10 [shape = 's32[1]{0}', space=sflag, size = 0x4, scoped, tag = 'scoped memory for tpu_custom_call.1']
    #allocation11 [shape = 'u8[32768]{0}', space=vmem, size = 0x8000, scoped, tag = 'input window, operand 5, single buffered']
    #allocation12 [shape = 'u8[32768]{0}', space=vmem, size = 0x8000, scoped, tag = 'input window, operand 7, single buffered']
    #allocation13 [shape = 's32[1]{0}', space=sflag, size = 0x4, scoped, tag = 'scoped memory for tpu_custom_call.1']
    #allocation14 [shape = 'u8[32768]{0}', space=vmem, size = 0x8000, scoped, tag = 'input window, operand 9, single buffered']
    #allocation15 [shape = 'u8[65536]{0}', space=vmem, size = 0x10000, scoped, tag = 'input window, operand 11, single buffered']
    #allocation16 [shape = 's32[1]{0}', space=sflag, size = 0x4, scoped, tag = 'scoped memory for tpu_custom_call.1']
    #allocation17 [shape = 'u8[16384]{0}', space=vmem, size = 0x4000, scoped, tag = 'output window, operand 0, single buffered']
    %18 = vsyncpa [#allocation4], 0
    %19 = vsyncpa [#allocation7], 0
    %20 = vsyncpa [#allocation10], 0
    %21 = vsyncpa [#allocation13], 0
    %22 = vsyncpa [#allocation16], 0
    %23 = vsyncpa [#allocation5], 0
    // Predicated region
    $region2: #{tpu_custom_call.1} parent=1 // pred_check
      _
    $region3: #{tpu_custom_call.1} parent=1 // pred_check_branch
      %25 = sbr.rel (0) target = $region5
    $region4: #{tpu_custom_call.1} parent=1 // pred_region
      %27 = vsyncadd [#allocation4], 0
      %s28 = sshll.u32 %s0, 4
      %s29 = int_to_ptr.hbm [resolvable:$true] %s28
      %s30 = sshll.u32 [#allocation3], 4
      %s31 = int_to_ptr.vmem [resolvable:$true] %s30
      %36 = dma.hbm_to_vmem [thread:$0]  %s29, 256, %s31, [#allocation4], 128, 128, 8
    $region5: #{tpu_custom_call.1} parent=1 // pred_fallthru
      _
    // Predicated region
    $region6: #{tpu_custom_call.1} parent=1 // pred_check
      _
    $region7: #{tpu_custom_call.1} parent=1 // pred_check_branch
      %38 = sbr.rel (0) target = $region9
    $region8: #{tpu_custom_call.1} parent=1 // pred_region
      %40 = vsyncadd [#allocation7], 0
      %s41 = sshll.u32 %s1, 4
      %s42 = int_to_ptr.hbm [resolvable:$true] %s41
      %s43 = sshll.u32 [#allocation6], 4
      %s44 = int_to_ptr.vmem [resolvable:$true] %s43
      %49 = dma.hbm_to_vmem [thread:$0]  %s42, 2048, %s44, [#allocation7], 64, 64, 4
    $region9: #{tpu_custom_call.1} parent=1 // pred_fallthru
      _
    // Predicated region
    $region10: #{tpu_custom_call.1} parent=1 // pred_check
      _
    $region11: #{tpu_custom_call.1} parent=1 // pred_check_branch
      %51 = sbr.rel (0) target = $region13
    $region12: #{tpu_custom_call.1} parent=1 // pred_region
      _
    $region13: #{tpu_custom_call.1} parent=1 // pred_fallthru
      _
    // Predicated region
    $region14: #{tpu_custom_call.1} parent=1 // pred_check
      _
    $region15: #{tpu_custom_call.1} parent=1 // pred_check_branch
      %53 = sbr.rel (0) target = $region17
    $region16: #{tpu_custom_call.1} parent=1 // pred_region
      %55 = vsyncadd [#allocation7], 0
      %s56 = sshll.u32 %s3, 4
      %s57 = int_to_ptr.hbm [resolvable:$true] %s56
      %s58 = sshll.u32 [#allocation8], 4
      %s59 = int_to_ptr.vmem [resolvable:$true] %s58
      %64 = dma.hbm_to_vmem [thread:$0]  %s57, 1024, %s59, [#allocation7], 64, 64, 4
    $region17: #{tpu_custom_call.1} parent=1 // pred_fallthru
      _
    // Predicated region
    $region18: #{tpu_custom_call.1} parent=1 // pred_check
      _
    $region19: #{tpu_custom_call.1} parent=1 // pred_check_branch
      %66 = sbr.rel (0) target = $region21
    $region20: #{tpu_custom_call.1} parent=1 // pred_region
      %68 = vsyncadd [#allocation10], 0
      %s70 = sshll.u32 %s4, 4
      %s71 = int_to_ptr.hbm [resolvable:$true] %s70
      %s72 = sshll.u32 [#allocation9], 4
      %s73 = int_to_ptr.vmem [resolvable:$true] %s72
      %75 = dma.hbm_to_vmem [thread:$0]  %s71, 16, %s73, [#allocation10]
    $region21: #{tpu_custom_call.1} parent=1 // pred_fallthru
      _
    // Predicated region
    $region22: #{tpu_custom_call.1} parent=1 // pred_check
      _
    $region23: #{tpu_custom_call.1} parent=1 // pred_check_branch
      %77 = sbr.rel (0) target = $region25
    $region24: #{tpu_custom_call.1} parent=1 // pred_region
      %79 = vsyncadd [#allocation10], 0
      %s80 = sshll.u32 %s5, 4
      %s81 = int_to_ptr.hbm [resolvable:$true] %s80
      %s82 = sshll.u32 [#allocation11], 4
      %s83 = int_to_ptr.vmem [resolvable:$true] %s82
      %88 = dma.hbm_to_vmem [thread:$0]  %s81, 1024, %s83, [#allocation10], 64, 64, 4
    $region25: #{tpu_custom_call.1} parent=1 // pred_fallthru
      _
    // Predicated region
    $region26: #{tpu_custom_call.1} parent=1 // pred_check
      _
    $region27: #{tpu_custom_call.1} parent=1 // pred_check_branch
      %90 = sbr.rel (0) target = $region29
    $region28: #{tpu_custom_call.1} parent=1 // pred_region
      _
    $region29: #{tpu_custom_call.1} parent=1 // pred_fallthru
      _
    // Predicated region
    $region30: #{tpu_custom_call.1} parent=1 // pred_check
      _
    $region31: #{tpu_custom_call.1} parent=1 // pred_check_branch
      %92 = sbr.rel (0) target = $region33
    $region32: #{tpu_custom_call.1} parent=1 // pred_region
      %94 = vsyncadd [#allocation13], 0
      %s95 = sshll.u32 %s7, 4
      %s96 = int_to_ptr.hbm [resolvable:$true] %s95
      %s97 = sshll.u32 [#allocation12], 4
      %s98 = int_to_ptr.vmem [resolvable:$true] %s97
      %103 = dma.hbm_to_vmem [thread:$0]  %s96, 1024, %s98, [#allocation13], 64, 64, 4
    $region33: #{tpu_custom_call.1} parent=1 // pred_fallthru
      _
    // Predicated region
    $region34: #{tpu_custom_call.1} parent=1 // pred_check
      _
    $region35: #{tpu_custom_call.1} parent=1 // pred_check_branch
      %105 = sbr.rel (0) target = $region37
    $region36: #{tpu_custom_call.1} parent=1 // pred_region
      _
    $region37: #{tpu_custom_call.1} parent=1 // pred_fallthru
      _
    // Predicated region
    $region38: #{tpu_custom_call.1} parent=1 // pred_check
      _
    $region39: #{tpu_custom_call.1} parent=1 // pred_check_branch
      %107 = sbr.rel (0) target = $region41
    $region40: #{tpu_custom_call.1} parent=1 // pred_region
      %109 = vsyncadd [#allocation13], 0
      %s110 = sshll.u32 %s9, 4
      %s111 = int_to_ptr.hbm [resolvable:$true] %s110
      %s112 = sshll.u32 [#allocation14], 4
      %s113 = int_to_ptr.vmem [resolvable:$true] %s112
      %118 = dma.hbm_to_vmem [thread:$0]  %s111, 1024, %s113, [#allocation13], 64, 64, 4
    $region41: #{tpu_custom_call.1} parent=1 // pred_fallthru
      _
    // Predicated region
    $region42: #{tpu_custom_call.1} parent=1 // pred_check
      _
    $region43: #{tpu_custom_call.1} parent=1 // pred_check_branch
      %120 = sbr.rel (0) target = $region45
    $region44: #{tpu_custom_call.1} parent=1 // pred_region
      _
    $region45: #{tpu_custom_call.1} parent=1 // pred_fallthru
      _
    // Predicated region
    $region46: #{tpu_custom_call.1} parent=1 // pred_check
      _
    $region47: #{tpu_custom_call.1} parent=1 // pred_check_branch
      %122 = sbr.rel (0) target = $region49
    $region48: #{tpu_custom_call.1} parent=1 // pred_region
      %124 = vsyncadd [#allocation16], 0
      %s125 = sshll.u32 %s11, 4
      %s126 = int_to_ptr.hbm [resolvable:$true] %s125
      %s127 = sshll.u32 [#allocation15], 4
      %s128 = int_to_ptr.vmem [resolvable:$true] %s127
      %133 = dma.hbm_to_vmem [thread:$0]  %s126, 2048, %s128, [#allocation16], 128, 128, 8
    $region49: #{tpu_custom_call.1} parent=1 // pred_fallthru
      _
    // Predicated region
    $region50: #{tpu_custom_call.1} parent=1 // pred_check
      _
    $region51: #{tpu_custom_call.1} parent=1 // pred_check_branch
      %135 = sbr.rel (0) target = $region53
    $region52: #{tpu_custom_call.1} parent=1 // pred_region
      _
    $region53: #{tpu_custom_call.1} parent=1 // pred_fallthru
      _
    // Predicated region
    $region54: #{tpu_custom_call.1} parent=1 // pred_check
      _
    $region55: #{tpu_custom_call.1} parent=1 // pred_check_branch
      %137 = sbr.rel (0) target = $region57
    $region56: #{tpu_custom_call.1} parent=1 // pred_region
      %139 = dma.done [#allocation4], 256
    $region57: #{tpu_custom_call.1} parent=1 // pred_fallthru
      _
    // Predicated region
    $region58: #{tpu_custom_call.1} parent=1 // pred_check
      _
    $region59: #{tpu_custom_call.1} parent=1 // pred_check_branch
      %141 = sbr.rel (0) target = $region61
    $region60: #{tpu_custom_call.1} parent=1 // pred_region
      %143 = dma.done [#allocation7], 2048
    $region61: #{tpu_custom_call.1} parent=1 // pred_fallthru
      _
    // Predicated region
    $region62: #{tpu_custom_call.1} parent=1 // pred_check
      _
    $region63: #{tpu_custom_call.1} parent=1 // pred_check_branch
      %145 = sbr.rel (0) target = $region65
    $region64: #{tpu_custom_call.1} parent=1 // pred_region
      %147 = dma.done [#allocation7], 1024
    $region65: #{tpu_custom_call.1} parent=1 // pred_fallthru
      _
    // Predicated region
    $region66: #{tpu_custom_call.1} parent=1 // pred_check
      _
    $region67: #{tpu_custom_call.1} parent=1 // pred_check_branch
      %149 = sbr.rel (0) target = $region69
    $region68: #{tpu_custom_call.1} parent=1 // pred_region
      %151 = dma.done [#allocation10], 16
    $region69: #{tpu_custom_call.1} parent=1 // pred_fallthru
      _
    // Predicated region
    $region70: #{tpu_custom_call.1} parent=1 // pred_check
      _
    $region71: #{tpu_custom_call.1} parent=1 // pred_check_branch
      %153 = sbr.rel (0) target = $region73
    $region72: #{tpu_custom_call.1} parent=1 // pred_region
      %155 = dma.done [#allocation10], 1024
    $region73: #{tpu_custom_call.1} parent=1 // pred_fallthru
      _
    // Predicated region
    $region74: #{tpu_custom_call.1} parent=1 // pred_check
      _
    $region75: #{tpu_custom_call.1} parent=1 // pred_check_branch
      %157 = sbr.rel (0) target = $region77
    $region76: #{tpu_custom_call.1} parent=1 // pred_region
      %159 = dma.done [#allocation13], 1024
    $region77: #{tpu_custom_call.1} parent=1 // pred_fallthru
      _
    // Predicated region
    $region78: #{tpu_custom_call.1} parent=1 // pred_check
      _
    $region79: #{tpu_custom_call.1} parent=1 // pred_check_branch
      %161 = sbr.rel (0) target = $region81
    $region80: #{tpu_custom_call.1} parent=1 // pred_region
      %163 = dma.done [#allocation13], 1024
    $region81: #{tpu_custom_call.1} parent=1 // pred_fallthru
      _
    // Predicated region
    $region82: #{tpu_custom_call.1} parent=1 // pred_check
      _
    $region83: #{tpu_custom_call.1} parent=1 // pred_check_branch
      %165 = sbr.rel (0) target = $region85
    $region84: #{tpu_custom_call.1} parent=1 // pred_region
      %167 = dma.done [#allocation16], 2048
    $region85: #{tpu_custom_call.1} parent=1 // pred_fallthru
      _
    %vm169 = vcmask 1043760
    %170 = vst.msk [vmem:[#allocation2 + $0x4] sm:$0xf] %vm169, 0
    %171 = vst.msk [vmem:[#allocation2 + $0xc] sm:$0xf] %vm169, 0
    %v172 = vld [vmem:[#allocation3] sm:$0xff]
    %v173 = vld [vmem:[#allocation3 + $0x8] sm:$0xff]
    %vm174 = vcmask 1043456
    %vm175 = vcmask 310276
    %vm176 = vmor %vm175, %vm174
    %177 = vst.msk [vmem:[#allocation2] sm:$0xff] %vm176, %v172
    %178 = vst.msk [vmem:[#allocation2 + $0x8] sm:$0xff] %vm176, %v173
    %v179 = vld [vmem:[#allocation2] sm:$0xff]
    %v180 = vld [vmem:[#allocation2 + $0x8] sm:$0xff]
    %v181 = vld [vmem:[#allocation6] sm:$0xf]
    %v182 = vld [vmem:[#allocation6 + $0x4] sm:$0xf]
    %v183 = vld [vmem:[#allocation6 + $0x8] sm:$0xf]
    %v184 = vld [vmem:[#allocation6 + $0xc] sm:$0xf]
    %v185 = vld [vmem:[#allocation6 + $0x10] sm:$0xf]
    %v186 = vld [vmem:[#allocation6 + $0x14] sm:$0xf]
    %v187 = vld [vmem:[#allocation6 + $0x18] sm:$0xf]
    %v188 = vld [vmem:[#allocation6 + $0x1c] sm:$0xf]
    %v189 = vld [vmem:[#allocation6 + $0x20] sm:$0xf]
    %v190 = vld [vmem:[#allocation6 + $0x24] sm:$0xf]
    %v191 = vld [vmem:[#allocation6 + $0x28] sm:$0xf]
    %v192 = vld [vmem:[#allocation6 + $0x2c] sm:$0xf]
    %v193 = vld [vmem:[#allocation6 + $0x30] sm:$0xf]
    %v194 = vld [vmem:[#allocation6 + $0x34] sm:$0xf]
    %v195 = vld [vmem:[#allocation6 + $0x38] sm:$0xf]
    %v196 = vld [vmem:[#allocation6 + $0x3c] sm:$0xf]
    %v197 = vld [vmem:[#allocation6 + $0x40] sm:$0xf]
    %v198 = vld [vmem:[#allocation6 + $0x44] sm:$0xf]
    %v199 = vld [vmem:[#allocation6 + $0x48] sm:$0xf]
    %v200 = vld [vmem:[#allocation6 + $0x4c] sm:$0xf]
    %v201 = vld [vmem:[#allocation6 + $0x50] sm:$0xf]
    %v202 = vld [vmem:[#allocation6 + $0x54] sm:$0xf]
    %v203 = vld [vmem:[#allocation6 + $0x58] sm:$0xf]
    %v204 = vld [vmem:[#allocation6 + $0x5c] sm:$0xf]
    %v205 = vld [vmem:[#allocation6 + $0x60] sm:$0xf]
    %v206 = vld [vmem:[#allocation6 + $0x64] sm:$0xf]
    %v207 = vld [vmem:[#allocation6 + $0x68] sm:$0xf]
    %v208 = vld [vmem:[#allocation6 + $0x6c] sm:$0xf]
    %v209 = vld [vmem:[#allocation6 + $0x70] sm:$0xf]
    %v210 = vld [vmem:[#allocation6 + $0x74] sm:$0xf]
    %v211 = vld [vmem:[#allocation6 + $0x78] sm:$0xf]
    %v212 = vld [vmem:[#allocation6 + $0x7c] sm:$0xf]
    %v213 = vld [vmem:[%s2] sm:$0x1]
    %v215 = vperm.slane %v213, 0
    %v219 = vunpack.c.l.b16 %v179
    %v220 = vunpack.c.h.b16 %v179
    %v221 = vunpack.c.l.b16 %v180
    %v222 = vunpack.c.h.b16 %v180
    %v223 = vpack.c.b16 %v221, %v219
    %v224 = vpack.c.b16 %v222, %v220
    %v259 = vunpack.c.l.b16 %v181
    %v260 = vunpack.c.l.b16 %v182
    %v261 = vunpack.c.l.b16 %v183
    %v262 = vunpack.c.l.b16 %v184
    %v263 = vunpack.c.l.b16 %v185
    %v264 = vunpack.c.l.b16 %v186
    %v265 = vunpack.c.l.b16 %v187
    %v266 = vunpack.c.l.b16 %v188
    %v267 = vunpack.c.l.b16 %v189
    %v268 = vunpack.c.l.b16 %v190
    %v269 = vunpack.c.l.b16 %v191
    %v270 = vunpack.c.l.b16 %v192
    %v271 = vunpack.c.l.b16 %v193
    %v272 = vunpack.c.l.b16 %v194
    %v273 = vunpack.c.l.b16 %v195
    %v274 = vunpack.c.l.b16 %v196
    %v275 = vunpack.c.l.b16 %v197
    %v276 = vunpack.c.l.b16 %v198
    %v277 = vunpack.c.l.b16 %v199
    %v278 = vunpack.c.l.b16 %v200
    %v279 = vunpack.c.l.b16 %v201
    %v280 = vunpack.c.l.b16 %v202
    %v281 = vunpack.c.l.b16 %v203
    %v282 = vunpack.c.l.b16 %v204
    %v283 = vunpack.c.l.b16 %v205
    %v284 = vunpack.c.l.b16 %v206
    %v285 = vunpack.c.l.b16 %v207
    %v286 = vunpack.c.l.b16 %v208
    %v287 = vunpack.c.l.b16 %v209
    %v288 = vunpack.c.l.b16 %v210
    %v289 = vunpack.c.l.b16 %v211
    %v290 = vunpack.c.l.b16 %v212
    %v291 = vpack.c.b16 %v260, %v259
    %v292 = vpack.c.b16 %v262, %v261
    %v293 = vpack.c.b16 %v264, %v263
    %v294 = vpack.c.b16 %v266, %v265
    %v295 = vpack.c.b16 %v268, %v267
    %v296 = vpack.c.b16 %v270, %v269
    %v297 = vpack.c.b16 %v272, %v271
    %v298 = vpack.c.b16 %v274, %v273
    %v299 = vpack.c.b16 %v276, %v275
    %v300 = vpack.c.b16 %v278, %v277
    %v301 = vpack.c.b16 %v280, %v279
    %v302 = vpack.c.b16 %v282, %v281
    %v303 = vpack.c.b16 %v284, %v283
    %v304 = vpack.c.b16 %v286, %v285
    %v305 = vpack.c.b16 %v288, %v287
    %v306 = vpack.c.b16 %v290, %v289
    %323 = vmatpush.bf16.msra.mxu0 %v298
    %324 = vmatpush.bf16.msra.mxu0 %v297
    %325 = vmatpush.bf16.msra.mxu0 %v296
    %326 = vmatpush.bf16.msra.mxu0 %v295
    %327 = vmatpush.bf16.msra.mxu0 %v294
    %328 = vmatpush.bf16.msra.mxu0 %v293
    %329 = vmatpush.bf16.msra.mxu0 %v292
    %330 = vmatpush.bf16.msra.mxu0 %v291
    %331 = vmatmul.bf16.gmra.mxu0 %v223
    %v332 = vpop.f32.mrf.mxu0
    %v333 = vadd.f32 %v215, %v332
    %v334 = vpop.f32.mrf.mxu0
    %v335 = vadd.f32 %v215, %v334
    %336 = vdwg.mxu0
    %337 = vmatpush.bf16.msra.mxu0 %v306
    %338 = vmatpush.bf16.msra.mxu0 %v305
    %339 = vmatpush.bf16.msra.mxu0 %v304
    %340 = vmatpush.bf16.msra.mxu0 %v303
    %341 = vmatpush.bf16.msra.mxu0 %v302
    %342 = vmatpush.bf16.msra.mxu0 %v301
    %343 = vmatpush.bf16.msra.mxu0 %v300
    %344 = vmatpush.bf16.msra.mxu0 %v299
    %345 = vmatmul.bf16.gmra.mxu0 %v224
    %v346 = vpop.f32.mrf.mxu0
    %v347 = vadd.f32 %v333, %v346
    %v348 = vpop.f32.mrf.mxu0
    %v349 = vadd.f32 %v335, %v348
    %350 = vdwg.mxu0
    %v351 = vmul.f32 %v347, 0.01
    %v352 = vmul.f32 %v349, 0.01
    %v353 = vmax.f32 %v347, %v351
    %v354 = vmax.f32 %v349, %v352
    %v355 = vpack.c.bf16 %v354, %v353
    %v356 = vld [vmem:[#allocation8] sm:$0xf]
    %v357 = vld [vmem:[#allocation8 + $0x4] sm:$0xf]
    %v358 = vld [vmem:[#allocation8 + $0x8] sm:$0xf]
    %v359 = vld [vmem:[#allocation8 + $0xc] sm:$0xf]
    %v360 = vld [vmem:[#allocation8 + $0x10] sm:$0xf]
    %v361 = vld [vmem:[#allocation8 + $0x14] sm:$0xf]
    %v362 = vld [vmem:[#allocation8 + $0x18] sm:$0xf]
    %v363 = vld [vmem:[#allocation8 + $0x1c] sm:$0xf]
    %v364 = vld [vmem:[#allocation8 + $0x20] sm:$0xf]
    %v365 = vld [vmem:[#allocation8 + $0x24] sm:$0xf]
    %v366 = vld [vmem:[#allocation8 + $0x28] sm:$0xf]
    %v367 = vld [vmem:[#allocation8 + $0x2c] sm:$0xf]
    %v368 = vld [vmem:[#allocation8 + $0x30] sm:$0xf]
    %v369 = vld [vmem:[#allocation8 + $0x34] sm:$0xf]
    %v370 = vld [vmem:[#allocation8 + $0x38] sm:$0xf]
    %v371 = vld [vmem:[#allocation8 + $0x3c] sm:$0xf]
    %v372 = vld [vmem:[#allocation9] sm:$0x1]
    %v374 = vperm.slane %v372, 0
    %v392 = vunpack.c.l.b16 %v356
    %v393 = vunpack.c.l.b16 %v357
    %v394 = vunpack.c.l.b16 %v358
    %v395 = vunpack.c.l.b16 %v359
    %v396 = vunpack.c.l.b16 %v360
    %v397 = vunpack.c.l.b16 %v361
    %v398 = vunpack.c.l.b16 %v362
    %v399 = vunpack.c.l.b16 %v363
    %v400 = vunpack.c.l.b16 %v364
    %v401 = vunpack.c.l.b16 %v365
    %v402 = vunpack.c.l.b16 %v366
    %v403 = vunpack.c.l.b16 %v367
    %v404 = vunpack.c.l.b16 %v368
    %v405 = vunpack.c.l.b16 %v369
    %v406 = vunpack.c.l.b16 %v370
    %v407 = vunpack.c.l.b16 %v371
    %v408 = vpack.c.b16 %v393, %v392
    %v409 = vpack.c.b16 %v395, %v394
    %v410 = vpack.c.b16 %v397, %v396
    %v411 = vpack.c.b16 %v399, %v398
    %v412 = vpack.c.b16 %v401, %v400
    %v413 = vpack.c.b16 %v403, %v402
    %v414 = vpack.c.b16 %v405, %v404
    %v415 = vpack.c.b16 %v407, %v406
    %424 = vmatpush.bf16.msra.mxu0 %v415
    %425 = vmatpush.bf16.msra.mxu0 %v414
    %426 = vmatpush.bf16.msra.mxu0 %v413
    %427 = vmatpush.bf16.msra.mxu0 %v412
    %428 = vmatpush.bf16.msra.mxu0 %v411
    %429 = vmatpush.bf16.msra.mxu0 %v410
    %430 = vmatpush.bf16.msra.mxu0 %v409
    %431 = vmatpush.bf16.msra.mxu0 %v408
    %432 = vmatmul.bf16.gmra.mxu0 %v355
    %v433 = vpop.f32.mrf.mxu0
    %v434 = vadd.f32 %v374, %v433
    %v435 = vpop.f32.mrf.mxu0
    %v436 = vadd.f32 %v374, %v435
    %437 = vdwg.mxu0
    %v438 = vmul.f32 %v434, 0.01
    %v439 = vmul.f32 %v436, 0.01
    %v440 = vmax.f32 %v434, %v438
    %v441 = vmax.f32 %v436, %v439
    %v442 = vpack.c.bf16 %v441, %v440
    %v443 = vld [vmem:[#allocation11] sm:$0xf]
    %v444 = vld [vmem:[#allocation11 + $0x4] sm:$0xf]
    %v445 = vld [vmem:[#allocation11 + $0x8] sm:$0xf]
    %v446 = vld [vmem:[#allocation11 + $0xc] sm:$0xf]
    %v447 = vld [vmem:[#allocation11 + $0x10] sm:$0xf]
    %v448 = vld [vmem:[#allocation11 + $0x14] sm:$0xf]
    %v449 = vld [vmem:[#allocation11 + $0x18] sm:$0xf]
    %v450 = vld [vmem:[#allocation11 + $0x1c] sm:$0xf]
    %v451 = vld [vmem:[#allocation11 + $0x20] sm:$0xf]
    %v452 = vld [vmem:[#allocation11 + $0x24] sm:$0xf]
    %v453 = vld [vmem:[#allocation11 + $0x28] sm:$0xf]
    %v454 = vld [vmem:[#allocation11 + $0x2c] sm:$0xf]
    %v455 = vld [vmem:[#allocation11 + $0x30] sm:$0xf]
    %v456 = vld [vmem:[#allocation11 + $0x34] sm:$0xf]
    %v457 = vld [vmem:[#allocation11 + $0x38] sm:$0xf]
    %v458 = vld [vmem:[#allocation11 + $0x3c] sm:$0xf]
    %v459 = vld [vmem:[%s6] sm:$0x1]
    %v461 = vperm.slane %v459, 0
    %v479 = vunpack.c.l.b16 %v443
    %v480 = vunpack.c.l.b16 %v444
    %v481 = vunpack.c.l.b16 %v445
    %v482 = vunpack.c.l.b16 %v446
    %v483 = vunpack.c.l.b16 %v447
    %v484 = vunpack.c.l.b16 %v448
    %v485 = vunpack.c.l.b16 %v449
    %v486 = vunpack.c.l.b16 %v450
    %v487 = vunpack.c.l.b16 %v451
    %v488 = vunpack.c.l.b16 %v452
    %v489 = vunpack.c.l.b16 %v453
    %v490 = vunpack.c.l.b16 %v454
    %v491 = vunpack.c.l.b16 %v455
    %v492 = vunpack.c.l.b16 %v456
    %v493 = vunpack.c.l.b16 %v457
    %v494 = vunpack.c.l.b16 %v458
    %v495 = vpack.c.b16 %v480, %v479
    %v496 = vpack.c.b16 %v482, %v481
    %v497 = vpack.c.b16 %v484, %v483
    %v498 = vpack.c.b16 %v486, %v485
    %v499 = vpack.c.b16 %v488, %v487
    %v500 = vpack.c.b16 %v490, %v489
    %v501 = vpack.c.b16 %v492, %v491
    %v502 = vpack.c.b16 %v494, %v493
    %511 = vmatpush.bf16.msra.mxu0 %v502
    %512 = vmatpush.bf16.msra.mxu0 %v501
    %513 = vmatpush.bf16.msra.mxu0 %v500
    %514 = vmatpush.bf16.msra.mxu0 %v499
    %515 = vmatpush.bf16.msra.mxu0 %v498
    %516 = vmatpush.bf16.msra.mxu0 %v497
    %517 = vmatpush.bf16.msra.mxu0 %v496
    %518 = vmatpush.bf16.msra.mxu0 %v495
    %519 = vmatmul.bf16.gmra.mxu0 %v442
    %v520 = vpop.f32.mrf.mxu0
    %v521 = vadd.f32 %v461, %v520
    %v522 = vpop.f32.mrf.mxu0
    %v523 = vadd.f32 %v461, %v522
    %524 = vdwg.mxu0
    %v525 = vmul.f32 %v521, 0.01
    %v526 = vmul.f32 %v523, 0.01
    %v527 = vmax.f32 %v521, %v525
    %v528 = vmax.f32 %v523, %v526
    %v529 = vpack.c.bf16 %v528, %v527
    %v530 = vld [vmem:[#allocation12] sm:$0xf]
    %v531 = vld [vmem:[#allocation12 + $0x4] sm:$0xf]
    %v532 = vld [vmem:[#allocation12 + $0x8] sm:$0xf]
    %v533 = vld [vmem:[#allocation12 + $0xc] sm:$0xf]
    %v534 = vld [vmem:[#allocation12 + $0x10] sm:$0xf]
    %v535 = vld [vmem:[#allocation12 + $0x14] sm:$0xf]
    %v536 = vld [vmem:[#allocation12 + $0x18] sm:$0xf]
    %v537 = vld [vmem:[#allocation12 + $0x1c] sm:$0xf]
    %v538 = vld [vmem:[#allocation12 + $0x20] sm:$0xf]
    %v539 = vld [vmem:[#allocation12 + $0x24] sm:$0xf]
    %v540 = vld [vmem:[#allocation12 + $0x28] sm:$0xf]
    %v541 = vld [vmem:[#allocation12 + $0x2c] sm:$0xf]
    %v542 = vld [vmem:[#allocation12 + $0x30] sm:$0xf]
    %v543 = vld [vmem:[#allocation12 + $0x34] sm:$0xf]
    %v544 = vld [vmem:[#allocation12 + $0x38] sm:$0xf]
    %v545 = vld [vmem:[#allocation12 + $0x3c] sm:$0xf]
    %v546 = vld [vmem:[%s8] sm:$0x1]
    %v548 = vperm.slane %v546, 0
    %v566 = vunpack.c.l.b16 %v530
    %v567 = vunpack.c.l.b16 %v531
    %v568 = vunpack.c.l.b16 %v532
    %v569 = vunpack.c.l.b16 %v533
    %v570 = vunpack.c.l.b16 %v534
    %v571 = vunpack.c.l.b16 %v535
    %v572 = vunpack.c.l.b16 %v536
    %v573 = vunpack.c.l.b16 %v537
    %v574 = vunpack.c.l.b16 %v538
    %v575 = vunpack.c.l.b16 %v539
    %v576 = vunpack.c.l.b16 %v540
    %v577 = vunpack.c.l.b16 %v541
    %v578 = vunpack.c.l.b16 %v542
    %v579 = vunpack.c.l.b16 %v543
    %v580 = vunpack.c.l.b16 %v544
    %v581 = vunpack.c.l.b16 %v545
    %v582 = vpack.c.b16 %v567, %v566
    %v583 = vpack.c.b16 %v569, %v568
    %v584 = vpack.c.b16 %v571, %v570
    %v585 = vpack.c.b16 %v573, %v572
    %v586 = vpack.c.b16 %v575, %v574
    %v587 = vpack.c.b16 %v577, %v576
    %v588 = vpack.c.b16 %v579, %v578
    %v589 = vpack.c.b16 %v581, %v580
    %598 = vmatpush.bf16.msra.mxu0 %v589
    %599 = vmatpush.bf16.msra.mxu0 %v588
    %600 = vmatpush.bf16.msra.mxu0 %v587
    %601 = vmatpush.bf16.msra.mxu0 %v586
    %602 = vmatpush.bf16.msra.mxu0 %v585
    %603 = vmatpush.bf16.msra.mxu0 %v584
    %604 = vmatpush.bf16.msra.mxu0 %v583
    %605 = vmatpush.bf16.msra.mxu0 %v582
    %606 = vmatmul.bf16.gmra.mxu0 %v529
    %v607 = vpop.f32.mrf.mxu0
    %v608 = vadd.f32 %v548, %v607
    %v609 = vpop.f32.mrf.mxu0
    %v610 = vadd.f32 %v548, %v609
    %611 = vdwg.mxu0
    %v612 = vmul.f32 %v608, 0.01
    %v613 = vmul.f32 %v610, 0.01
    %v614 = vmax.f32 %v608, %v612
    %v615 = vmax.f32 %v610, %v613
    %v616 = vpack.c.bf16 %v615, %v614
    %v617 = vld [vmem:[#allocation14] sm:$0xf]
    %v618 = vld [vmem:[#allocation14 + $0x4] sm:$0xf]
    %v619 = vld [vmem:[#allocation14 + $0x8] sm:$0xf]
    %v620 = vld [vmem:[#allocation14 + $0xc] sm:$0xf]
    %v621 = vld [vmem:[#allocation14 + $0x10] sm:$0xf]
    %v622 = vld [vmem:[#allocation14 + $0x14] sm:$0xf]
    %v623 = vld [vmem:[#allocation14 + $0x18] sm:$0xf]
    %v624 = vld [vmem:[#allocation14 + $0x1c] sm:$0xf]
    %v625 = vld [vmem:[#allocation14 + $0x20] sm:$0xf]
    %v626 = vld [vmem:[#allocation14 + $0x24] sm:$0xf]
    %v627 = vld [vmem:[#allocation14 + $0x28] sm:$0xf]
    %v628 = vld [vmem:[#allocation14 + $0x2c] sm:$0xf]
    %v629 = vld [vmem:[#allocation14 + $0x30] sm:$0xf]
    %v630 = vld [vmem:[#allocation14 + $0x34] sm:$0xf]
    %v631 = vld [vmem:[#allocation14 + $0x38] sm:$0xf]
    %v632 = vld [vmem:[#allocation14 + $0x3c] sm:$0xf]
    %v633 = vld [vmem:[%s10] sm:$0x1]
    %v635 = vperm.slane %v633, 0
    %v653 = vunpack.c.l.b16 %v617
    %v654 = vunpack.c.l.b16 %v618
    %v655 = vunpack.c.l.b16 %v619
    %v656 = vunpack.c.l.b16 %v620
    %v657 = vunpack.c.l.b16 %v621
    %v658 = vunpack.c.l.b16 %v622
    %v659 = vunpack.c.l.b16 %v623
    %v660 = vunpack.c.l.b16 %v624
    %v661 = vunpack.c.l.b16 %v625
    %v662 = vunpack.c.l.b16 %v626
    %v663 = vunpack.c.l.b16 %v627
    %v664 = vunpack.c.l.b16 %v628
    %v665 = vunpack.c.l.b16 %v629
    %v666 = vunpack.c.l.b16 %v630
    %v667 = vunpack.c.l.b16 %v631
    %v668 = vunpack.c.l.b16 %v632
    %v669 = vpack.c.b16 %v654, %v653
    %v670 = vpack.c.b16 %v656, %v655
    %v671 = vpack.c.b16 %v658, %v657
    %v672 = vpack.c.b16 %v660, %v659
    %v673 = vpack.c.b16 %v662, %v661
    %v674 = vpack.c.b16 %v664, %v663
    %v675 = vpack.c.b16 %v666, %v665
    %v676 = vpack.c.b16 %v668, %v667
    %685 = vmatpush.bf16.msra.mxu0 %v676
    %686 = vmatpush.bf16.msra.mxu0 %v675
    %687 = vmatpush.bf16.msra.mxu0 %v674
    %688 = vmatpush.bf16.msra.mxu0 %v673
    %689 = vmatpush.bf16.msra.mxu0 %v672
    %690 = vmatpush.bf16.msra.mxu0 %v671
    %691 = vmatpush.bf16.msra.mxu0 %v670
    %692 = vmatpush.bf16.msra.mxu0 %v669
    %693 = vmatmul.bf16.gmra.mxu0 %v616
    %v694 = vpop.f32.mrf.mxu0
    %v695 = vadd.f32 %v635, %v694
    %v696 = vpop.f32.mrf.mxu0
    %v697 = vadd.f32 %v635, %v696
    %698 = vdwg.mxu0
    %v699 = vmul.f32 %v695, 0.01
    %v700 = vmul.f32 %v697, 0.01
    %v701 = vmax.f32 %v695, %v699
    %v702 = vmax.f32 %v697, %v700
    %v703 = vpack.c.bf16 %v702, %v701
    %v704 = vld [vmem:[#allocation15] sm:$0xff]
    %v705 = vld [vmem:[#allocation15 + $0x8] sm:$0xff]
    %v706 = vld [vmem:[#allocation15 + $0x10] sm:$0xff]
    %v707 = vld [vmem:[#allocation15 + $0x18] sm:$0xff]
    %v708 = vld [vmem:[#allocation15 + $0x20] sm:$0xff]
    %v709 = vld [vmem:[#allocation15 + $0x28] sm:$0xff]
    %v710 = vld [vmem:[#allocation15 + $0x30] sm:$0xff]
    %v711 = vld [vmem:[#allocation15 + $0x38] sm:$0xff]
    %v712 = vld [vmem:[#allocation15 + $0x40] sm:$0xff]
    %v713 = vld [vmem:[#allocation15 + $0x48] sm:$0xff]
    %v714 = vld [vmem:[#allocation15 + $0x50] sm:$0xff]
    %v715 = vld [vmem:[#allocation15 + $0x58] sm:$0xff]
    %v716 = vld [vmem:[#allocation15 + $0x60] sm:$0xff]
    %v717 = vld [vmem:[#allocation15 + $0x68] sm:$0xff]
    %v718 = vld [vmem:[#allocation15 + $0x70] sm:$0xff]
    %v719 = vld [vmem:[#allocation15 + $0x78] sm:$0xff]
    %v720 = vld [vmem:[%s12] sm:$0x3]
    %v722 = vperm.slane %v720, 0
    %v723 = vperm.slane %v720, 1
    %v742 = vunpack.c.l.b16 %v704
    %v743 = vunpack.c.h.b16 %v704
    %v744 = vunpack.c.l.b16 %v705
    %v745 = vunpack.c.h.b16 %v705
    %v746 = vunpack.c.l.b16 %v706
    %v747 = vunpack.c.h.b16 %v706
    %v748 = vunpack.c.l.b16 %v707
    %v749 = vunpack.c.h.b16 %v707
    %v750 = vunpack.c.l.b16 %v708
    %v751 = vunpack.c.h.b16 %v708
    %v752 = vunpack.c.l.b16 %v709
    %v753 = vunpack.c.h.b16 %v709
    %v754 = vunpack.c.l.b16 %v710
    %v755 = vunpack.c.h.b16 %v710
    %v756 = vunpack.c.l.b16 %v711
    %v757 = vunpack.c.h.b16 %v711
    %v758 = vunpack.c.l.b16 %v712
    %v759 = vunpack.c.h.b16 %v712
    %v760 = vunpack.c.l.b16 %v713
    %v761 = vunpack.c.h.b16 %v713
    %v762 = vunpack.c.l.b16 %v714
    %v763 = vunpack.c.h.b16 %v714
    %v764 = vunpack.c.l.b16 %v715
    %v765 = vunpack.c.h.b16 %v715
    %v766 = vunpack.c.l.b16 %v716
    %v767 = vunpack.c.h.b16 %v716
    %v768 = vunpack.c.l.b16 %v717
    %v769 = vunpack.c.h.b16 %v717
    %v770 = vunpack.c.l.b16 %v718
    %v771 = vunpack.c.h.b16 %v718
    %v772 = vunpack.c.l.b16 %v719
    %v773 = vunpack.c.h.b16 %v719
    %v774 = vpack.c.b16 %v744, %v742
    %v775 = vpack.c.b16 %v745, %v743
    %v776 = vpack.c.b16 %v748, %v746
    %v777 = vpack.c.b16 %v749, %v747
    %v778 = vpack.c.b16 %v752, %v750
    %v779 = vpack.c.b16 %v753, %v751
    %v780 = vpack.c.b16 %v756, %v754
    %v781 = vpack.c.b16 %v757, %v755
    %v782 = vpack.c.b16 %v760, %v758
    %v783 = vpack.c.b16 %v761, %v759
    %v784 = vpack.c.b16 %v764, %v762
    %v785 = vpack.c.b16 %v765, %v763
    %v786 = vpack.c.b16 %v768, %v766
    %v787 = vpack.c.b16 %v769, %v767
    %v788 = vpack.c.b16 %v772, %v770
    %v789 = vpack.c.b16 %v773, %v771
    %806 = vmatpush.bf16.msra.mxu0 %v788
    %807 = vmatpush.bf16.msra.mxu0 %v786
    %808 = vmatpush.bf16.msra.mxu0 %v784
    %809 = vmatpush.bf16.msra.mxu0 %v782
    %810 = vmatpush.bf16.msra.mxu0 %v780
    %811 = vmatpush.bf16.msra.mxu0 %v778
    %812 = vmatpush.bf16.msra.mxu0 %v776
    %813 = vmatpush.bf16.msra.mxu0 %v774
    %814 = vmatmul.bf16.gmra.mxu0 %v703
    %v815 = vpop.f32.mrf.mxu0
    %v816 = vadd.f32 %v722, %v815
    %v817 = vpop.f32.mrf.mxu0
    %v818 = vadd.f32 %v722, %v817
    %819 = vdwg.mxu0
    %820 = vmatpush.bf16.msra.mxu0 %v789
    %821 = vmatpush.bf16.msra.mxu0 %v787
    %822 = vmatpush.bf16.msra.mxu0 %v785
    %823 = vmatpush.bf16.msra.mxu0 %v783
    %824 = vmatpush.bf16.msra.mxu0 %v781
    %825 = vmatpush.bf16.msra.mxu0 %v779
    %826 = vmatpush.bf16.msra.mxu0 %v777
    %827 = vmatpush.bf16.msra.mxu0 %v775
    %828 = vmatmul.bf16.gmra.mxu0 %v703
    %v829 = vpop.f32.mrf.mxu0
    %v830 = vadd.f32 %v723, %v829
    %v831 = vpop.f32.mrf.mxu0
    %v832 = vadd.f32 %v723, %v831
    %833 = vdwg.mxu0
    %v834 = vmul.f32 %v816, 0.01
    %v835 = vmul.f32 %v830, 0.01
    %v836 = vmul.f32 %v818, 0.01
    %v837 = vmul.f32 %v832, 0.01
    %v838 = vmax.f32 %v816, %v834
    %v839 = vmax.f32 %v830, %v835
    %v840 = vmax.f32 %v818, %v836
    %v841 = vmax.f32 %v832, %v837
    %842 = vst [vmem:[#allocation17] sm:$0xff] %v838
    %vm843 = vcmask 310272
    %844 = vst.msk [vmem:[#allocation17 + $0x8] sm:$0xff] %vm843, %v839
    %845 = vst [vmem:[#allocation17 + $0x10] sm:$0xff] %v840
    %846 = vst.msk [vmem:[#allocation17 + $0x18] sm:$0xff] %vm843, %v841
    // Predicated region
    $region86: #{tpu_custom_call.1} parent=1 // pred_check
      _
    $region87: #{tpu_custom_call.1} parent=1 // pred_check_branch
      %848 = sbr.rel (0) target = $region89
    $region88: #{tpu_custom_call.1} parent=1 // pred_region
      %850 = vsyncadd [#allocation5], 0
      %s851 = sshll.u32 [#allocation17], 4
      %s852 = int_to_ptr.vmem [resolvable:$true] %s851
      %s853 = sshll.u32 %s13, 4
      %s854 = int_to_ptr.hbm [resolvable:$true] %s853
      %859 = dma.vmem_to_hbm [thread:$0]  %s852, 512, %s854, [#allocation5], 256, 256, 16
    $region89: #{tpu_custom_call.1} parent=1 // pred_fallthru
      _
    // Predicated region
    $region90: #{tpu_custom_call.1} parent=1 // pred_check
      _
    $region91: #{tpu_custom_call.1} parent=1 // pred_check_branch
      %861 = sbr.rel (0) target = $region93
    $region92: #{tpu_custom_call.1} parent=1 // pred_region
      %863 = dma.done [#allocation5], 512
    $region93: #{tpu_custom_call.1} parent=1 // pred_fallthru
      _
    %864 = vsyncpa [#allocation4], 1
    %865 = vsyncpa [#allocation7], 1
    %866 = vsyncpa [#allocation10], 1
    %867 = vsyncpa [#allocation13], 1
    %868 = vsyncpa [#allocation16], 1
    %869 = vsyncpa [#allocation5], 1

</llo_original>
